<compile_context>
chip_gen: v7x
topology: tpu7x:2x2x1
jax: 0.10.0
libtpu: 0.0.40
codegen_flags: <defaults>
</compile_context>

<pallas_src>
import math

import jax
import jax.numpy as jnp
import numpy as np
from jax.experimental import pallas as pl
from jax.experimental.pallas import tpu as pltpu

_INV_SQRT2 = 1.0 / math.sqrt(2.0)
_NEG_BIG = -1e30  # finite "-inf" for padded class columns (keeps 0 * logp == 0)


def _lm_projection_kernel(edge_ref, w1_ref, b1_ref, w2_ref, b2_ref, wyoh_ref,
                          probs_ref, wnll_ref, wsum_ref):
    # linear1: [TE, 2Hp](bf16) @ [2Hp, H2p](bf16) -> f32 accumulate, + b1.
    h = jnp.dot(edge_ref[...], w1_ref[...],
                preferred_element_type=jnp.float32) + b1_ref[...]
    # Exact (erf-based) GELU == torch.nn.functional.gelu default, kept in f32.
    h = 0.5 * h * (1.0 + jax.lax.erf(h * _INV_SQRT2))
    # linear2: [TE, H2p](bf16) @ [H2p, Cp](bf16) -> f32, + b2
    # (padded class columns of b2 hold -1e30, padded rows/cols of w2 are 0).
    logits = jnp.dot(h.astype(w2_ref.dtype), w2_ref[...],
                     preferred_element_type=jnp.float32) + b2_ref[...]

    # Stable softmax / log-softmax over the lane-padded class axis.
    m = jnp.max(logits, axis=-1, keepdims=True)
    z = logits - m
    ez = jnp.exp(z)
    se = jnp.sum(ez, axis=-1, keepdims=True)
    probs_ref[...] = (ez * pl.reciprocal(se, approx=True)).astype(probs_ref.dtype)
    log_probs = z - jnp.log(se)

    # Weighted cross-entropy partial sums for this tile.
    # wyoh = one_hot(y) * class_weight (padded rows / padded class cols are 0):
    #   w[y_i] * nll_i = -sum_c wyoh[i, c] * log_probs[i, c]
    #   w[y_i]         =  sum_c wyoh[i, c]
    wyoh = wyoh_ref[...]
    wnll = jnp.sum(jnp.sum(-wyoh * log_probs, axis=-1, keepdims=True),
                   axis=0, keepdims=True)                        # (1, 1)
    wsum = jnp.sum(jnp.sum(wyoh, axis=-1, keepdims=True),
                   axis=0, keepdims=True)                        # (1, 1)
    # Per-tile partial outputs (no resident accumulator -> grid stays parallel).
    wnll_ref[...] = jnp.broadcast_to(wnll, wnll_ref.shape)
    wsum_ref[...] = jnp.broadcast_to(wsum, wsum_ref.shape)


def _round_up(n, m):
    return ((n + m - 1) // m) * m


def lm_projection_head(edge_repr, w1, b1, w2, b2, class_w, y_onehot, *,
                       tile_e=512):
    """edge_repr: [E, 2H], w1: [2H, H2], b1: [1, H2], w2: [H2, C], b2: [1, C],
    class_w: [1, C], y_onehot: [E, C].  Returns (loss, probs[E, C])."""
    E, twoH = edge_repr.shape
    H2 = w1.shape[1]
    C = w2.shape[1]

    # Small problems run in a single grid step; large ones use big edge tiles.
    if E <= tile_e:
        tile_e = _round_up(E, 16)
    E_p = _round_up(E, tile_e)
    n_tiles = E_p // tile_e

    # Pad every feature axis to the 128-lane width (lane-dense DMAs/stores,
    # full MXU tiles).  Padded rows contribute exactly zero to the loss.
    twoH_p = _round_up(twoH, 128)
    H2_p = _round_up(H2, 128)
    C_p = _round_up(C, 128)

    f32 = jnp.float32
    edge_p = jnp.zeros((E_p, twoH_p), f32).at[:E, :twoH].set(edge_repr)
    w1_p = jnp.zeros((twoH_p, H2_p), f32).at[:twoH, :H2].set(w1)
    b1_p = jnp.zeros((1, H2_p), f32).at[:, :H2].set(b1)
    w2_p = jnp.zeros((H2_p, C_p), f32).at[:H2, :C].set(w2)
    b2_p = jnp.full((1, C_p), _NEG_BIG, f32).at[:, :C].set(b2)
    # Fold class weights into the one-hot labels (single streamed label tensor).
    wyoh_p = jnp.zeros((E_p, C_p), f32).at[:E, :C].set(y_onehot * class_w)

    # bf16 MXU operands; accumulation stays in f32 inside the kernel.
    edge_p = edge_p.astype(jnp.bfloat16)
    w1_p = w1_p.astype(jnp.bfloat16)
    w2_p = w2_p.astype(jnp.bfloat16)

    probs_p, wnll_p, wsum_p = pl.pallas_call(
        _lm_projection_kernel,
        out_shape=(
            jax.ShapeDtypeStruct((E_p, C_p), jnp.float32),        # probs (padded)
            jax.ShapeDtypeStruct((n_tiles * 8, 128), jnp.float32),  # per-tile wnll
            jax.ShapeDtypeStruct((n_tiles * 8, 128), jnp.float32),  # per-tile wsum
        ),
        grid_spec=pltpu.PrefetchScalarGridSpec(
            num_scalar_prefetch=0,
            grid=(n_tiles,),
            in_specs=[
                pl.BlockSpec((tile_e, twoH_p), lambda i: (i, 0)),  # edge tile
                pl.BlockSpec((twoH_p, H2_p), lambda i: (0, 0)),    # w1 (resident)
                pl.BlockSpec((1, H2_p), lambda i: (0, 0)),         # b1
                pl.BlockSpec((H2_p, C_p), lambda i: (0, 0)),       # w2
                pl.BlockSpec((1, C_p), lambda i: (0, 0)),          # b2 (+pad bias)
                pl.BlockSpec((tile_e, C_p), lambda i: (i, 0)),     # weighted one-hot
            ],
            out_specs=[
                pl.BlockSpec((tile_e, C_p), lambda i: (i, 0)),     # probs tile
                pl.BlockSpec((8, 128), lambda i: (i, 0)),          # wnll partial
                pl.BlockSpec((8, 128), lambda i: (i, 0)),          # wsum partial
            ],
        ),
        compiler_params=pltpu.CompilerParams(
            dimension_semantics=("parallel",)),  # per-tile partials -> 2 TCs on v7x
    )(edge_p, w1_p, b1_p, w2_p, b2_p, wyoh_p)

    wnll_total = jnp.sum(wnll_p.reshape(n_tiles, 8, 128)[:, 0, 0])
    wsum_total = jnp.sum(wsum_p.reshape(n_tiles, 8, 128)[:, 0, 0])
    loss = wnll_total / wsum_total
    probs = probs_p[:E, :C]
    return loss, probs


def _xavier_uniform(key, fan_in, fan_out):
    bound = math.sqrt(6.0 / (fan_in + fan_out))
    # stored as [in, out] (transpose of torch's [out, in])
    return jax.random.uniform(key, (fan_in, fan_out), jnp.float32, -bound, bound)


if __name__ == "__main__":
    # --- synthetic problem sizes (small, consistent with the module) ---
    hidden = 32               # config.hidden_size
    gnn_h2 = 32               # args.gnn_layer1_out_dim
    num_classes = 2           # binary edge classification
    edge_percent = 0.3        # class weights = [0.3, 0.7]
    num_graphs = 2
    nodes_per_graph = 8
    num_nodes = num_graphs * nodes_per_graph       # 16
    edges_per_graph = 32
    num_edges = num_graphs * edges_per_graph       # 64

    key = jax.random.PRNGKey(0)
    k_x, k_e, k_y, k_w1, k_b1, k_w2, k_b2 = jax.random.split(key, 7)

    # Node CLS features (stand-in for the BERT pooled output); dropout is
    # identity in eval mode.
    x = jax.random.normal(k_x, (num_nodes, hidden), jnp.float32)

    # all_edges: per-graph local edge endpoints, offset into global node ids
    # (mirrors the python loop building edge_repr in the reference).
    local_edges = jax.random.randint(
        k_e, (num_graphs, edges_per_graph, 2), 0, nodes_per_graph)
    offsets = (jnp.arange(num_graphs) * nodes_per_graph)[:, None, None]
    global_edges = (local_edges + offsets).reshape(num_edges, 2)
    src = global_edges[:, 0]
    dst = global_edges[:, 1]

    # edge_repr[i] = concat(x[src_i], x[dst_i])   (gather/concat = glue)
    edge_repr = jnp.concatenate([x[src], x[dst]], axis=1)       # [E, 2H]

    ylabels = jax.random.randint(k_y, (num_edges,), 0, num_classes)
    y_onehot = jax.nn.one_hot(ylabels, num_classes, dtype=jnp.float32)

    # Parameters (deterministic, xavier_uniform like the module).
    w1 = _xavier_uniform(k_w1, 2 * hidden, gnn_h2)
    b1 = jax.random.uniform(k_b1, (1, gnn_h2), jnp.float32,
                            -1.0 / math.sqrt(2 * hidden), 1.0 / math.sqrt(2 * hidden))
    w2 = _xavier_uniform(k_w2, gnn_h2, num_classes)
    b2 = jax.random.uniform(k_b2, (1, num_classes), jnp.float32,
                            -1.0 / math.sqrt(gnn_h2), 1.0 / math.sqrt(gnn_h2))
    class_w = jnp.array([[edge_percent, 1.0 - edge_percent]], jnp.float32)

    loss, probs = jax.jit(lm_projection_head)(
        edge_repr, w1, b1, w2, b2, class_w, y_onehot)
    jax.block_until_ready((loss, probs))

    # --- pure-JAX reference (same bf16 MXU-operand rounding as the kernel) ---
    e_bf = edge_repr.astype(jnp.bfloat16)
    w1_bf = w1.astype(jnp.bfloat16)
    w2_bf = w2.astype(jnp.bfloat16)
    h_ref = jnp.dot(e_bf, w1_bf, preferred_element_type=jnp.float32) + b1
    h_ref = 0.5 * h_ref * (1.0 + jax.scipy.special.erf(h_ref / math.sqrt(2.0)))
    logits_ref = jnp.dot(h_ref.astype(jnp.bfloat16), w2_bf,
                         preferred_element_type=jnp.float32) + b2
    probs_ref = jax.nn.softmax(logits_ref, axis=-1)
    logp_ref = jax.nn.log_softmax(logits_ref, axis=-1)
    nll_ref = -jnp.take_along_axis(logp_ref, ylabels[:, None], axis=1)[:, 0]
    w_ref = class_w[0][ylabels]
    loss_ref = jnp.sum(w_ref * nll_ref) / jnp.sum(w_ref)

    # probs go through the EUP approx reciprocal -> slightly looser tolerance;
    # the loss path uses exact exp/log.
    np.testing.assert_allclose(np.asarray(probs), np.asarray(probs_ref),
                               rtol=5e-3, atol=5e-3)
    np.testing.assert_allclose(float(loss), float(loss_ref),
                               rtol=1e-3, atol=1e-3)

    print("KERNEL_OK")
</pallas_src>

<mosaic_0001>
module attributes {stable_mosaic.version = 11 : i64} {
  func.func @_lm_projection_kernel(%arg0: i32, %arg1: memref<64x128xbf16, #tpu.memory_space<vmem>>, %arg2: memref<128x128xbf16, #tpu.memory_space<vmem>>, %arg3: memref<1x128xf32, #tpu.memory_space<vmem>>, %arg4: memref<128x128xbf16, #tpu.memory_space<vmem>>, %arg5: memref<1x128xf32, #tpu.memory_space<vmem>>, %arg6: memref<64x128xf32, #tpu.memory_space<vmem>>, %arg7: memref<64x128xf32, #tpu.memory_space<vmem>>, %arg8: memref<8x128xf32, #tpu.memory_space<vmem>>, %arg9: memref<8x128xf32, #tpu.memory_space<vmem>>) attributes {dimension_semantics = [#tpu.dimension_semantics<parallel>], iteration_bounds = array<i64: 1>, scalar_prefetch = 0 : i64, scratch_operands = 0 : i64, tpu.core_type = #tpu.core_type<tc>, window_params = [{transform_indices = @transform_0, window_bounds = array<i64: 64, 128>}, {pipeline_mode = #tpu.pipeline_mode<synchronous>, transform_indices = @transform_1, window_bounds = array<i64: 128, 128>}, {pipeline_mode = #tpu.pipeline_mode<synchronous>, transform_indices = @transform_2, window_bounds = array<i64: 1, 128>}, {pipeline_mode = #tpu.pipeline_mode<synchronous>, transform_indices = @transform_3, window_bounds = array<i64: 128, 128>}, {pipeline_mode = #tpu.pipeline_mode<synchronous>, transform_indices = @transform_4, window_bounds = array<i64: 1, 128>}, {transform_indices = @transform_5, window_bounds = array<i64: 64, 128>}, {transform_indices = @transform_6, window_bounds = array<i64: 64, 128>}, {transform_indices = @transform_7, window_bounds = array<i64: 8, 128>}, {transform_indices = @transform_8, window_bounds = array<i64: 8, 128>}]} {
    %c0 = arith.constant 0 : index
    %c0_0 = arith.constant 0 : index
    %0 = vector.load %arg1[%c0, %c0_0] : memref<64x128xbf16, #tpu.memory_space<vmem>>, vector<64x128xbf16>
    %c0_1 = arith.constant 0 : index
    %c0_2 = arith.constant 0 : index
    %1 = vector.load %arg2[%c0_1, %c0_2] : memref<128x128xbf16, #tpu.memory_space<vmem>>, vector<128x128xbf16>
    %cst = arith.constant dense<0.000000e+00> : vector<64x128xf32>
    %2 = tpu.matmul %0, %1, %cst {dimension_numbers = #tpu.dot_dimension_numbers<[1], [0], [0], [1], [0, 0, 1, 1], [], []>} : vector<64x128xbf16>, vector<128x128xbf16>, vector<64x128xf32> -> vector<64x128xf32>
    %c0_3 = arith.constant 0 : index
    %c0_4 = arith.constant 0 : index
    %3 = vector.load %arg3[%c0_3, %c0_4] : memref<1x128xf32, #tpu.memory_space<vmem>>, vector<1x128xf32>
    %4 = vector.broadcast %3 : vector<1x128xf32> to vector<64x128xf32>
    %5 = arith.addf %2, %4 : vector<64x128xf32>
    %cst_5 = arith.constant 5.000000e-01 : f32
    %6 = vector.broadcast %cst_5 : f32 to vector<64x128xf32>
    %7 = arith.mulf %6, %5 : vector<64x128xf32>
    %cst_6 = arith.constant 0.707106769 : f32
    %8 = vector.broadcast %cst_6 : f32 to vector<64x128xf32>
    %9 = arith.mulf %5, %8 : vector<64x128xf32>
    %10 = math.erf %9 : vector<64x128xf32>
    %cst_7 = arith.constant 1.000000e+00 : f32
    %11 = vector.broadcast %cst_7 : f32 to vector<64x128xf32>
    %12 = arith.addf %11, %10 : vector<64x128xf32>
    %13 = arith.mulf %7, %12 : vector<64x128xf32>
    %14 = arith.truncf %13 : vector<64x128xf32> to vector<64x128xbf16>
    %c0_8 = arith.constant 0 : index
    %c0_9 = arith.constant 0 : index
    %15 = vector.load %arg4[%c0_8, %c0_9] : memref<128x128xbf16, #tpu.memory_space<vmem>>, vector<128x128xbf16>
    %cst_10 = arith.constant dense<0.000000e+00> : vector<64x128xf32>
    %16 = tpu.matmul %14, %15, %cst_10 {dimension_numbers = #tpu.dot_dimension_numbers<[1], [0], [0], [1], [0, 0, 1, 1], [], []>} : vector<64x128xbf16>, vector<128x128xbf16>, vector<64x128xf32> -> vector<64x128xf32>
    %c0_11 = arith.constant 0 : index
    %c0_12 = arith.constant 0 : index
    %17 = vector.load %arg5[%c0_11, %c0_12] : memref<1x128xf32, #tpu.memory_space<vmem>>, vector<1x128xf32>
    %18 = vector.broadcast %17 : vector<1x128xf32> to vector<64x128xf32>
    %19 = arith.addf %16, %18 : vector<64x128xf32>
    %cst_13 = arith.constant dense<0xFF800000> : vector<64xf32>
    %20 = vector.multi_reduction <maximumf>, %19, %cst_13 [1] : vector<64x128xf32> to vector<64xf32>
    %21 = vector.shape_cast %20 : vector<64xf32> to vector<64x1xf32>
    %22 = vector.broadcast %21 : vector<64x1xf32> to vector<64x128xf32>
    %23 = arith.subf %19, %22 : vector<64x128xf32>
    %24 = math.exp %23 : vector<64x128xf32>
    %cst_14 = arith.constant dense<0.000000e+00> : vector<64xf32>
    %25 = vector.multi_reduction <add>, %24, %cst_14 [1] : vector<64x128xf32> to vector<64xf32>
    %26 = vector.shape_cast %25 : vector<64xf32> to vector<64x1xf32>
    %27 = tpu.reciprocal %26 {approx = true} : vector<64x1xf32> -> vector<64x1xf32>
    %28 = vector.broadcast %27 : vector<64x1xf32> to vector<64x128xf32>
    %29 = arith.mulf %24, %28 : vector<64x128xf32>
    %c0_15 = arith.constant 0 : index
    %c0_16 = arith.constant 0 : index
    %30 = vector.load %arg7[%c0_15, %c0_16] : memref<64x128xf32, #tpu.memory_space<vmem>>, vector<64x128xf32>
    tpu.vector_store %arg7[%c0_15, %c0_16], %29 {strides = array<i32>} : memref<64x128xf32, #tpu.memory_space<vmem>>, vector<64x128xf32>,
    %31 = math.log %26 : vector<64x1xf32>
    %32 = vector.broadcast %31 : vector<64x1xf32> to vector<64x128xf32>
    %33 = arith.subf %23, %32 : vector<64x128xf32>
    %c0_17 = arith.constant 0 : index
    %c0_18 = arith.constant 0 : index
    %34 = vector.load %arg6[%c0_17, %c0_18] : memref<64x128xf32, #tpu.memory_space<vmem>>, vector<64x128xf32>
    %cst_19 = arith.constant 0.000000e+00 : f32
    %35 = vector.broadcast %cst_19 : f32 to vector<64x128xf32>
    %36 = arith.subf %35, %34 : vector<64x128xf32>
    %37 = arith.mulf %36, %33 : vector<64x128xf32>
    %cst_20 = arith.constant dense<0.000000e+00> : vector<64xf32>
    %38 = vector.multi_reduction <add>, %37, %cst_20 [1] : vector<64x128xf32> to vector<64xf32>
    %39 = vector.shape_cast %38 : vector<64xf32> to vector<64x1xf32>
    %cst_21 = arith.constant dense<0.000000e+00> : vector<1xf32>
    %40 = vector.multi_reduction <add>, %39, %cst_21 [0] : vector<64x1xf32> to vector<1xf32>
    %41 = vector.shape_cast %40 : vector<1xf32> to vector<1x1xf32>
    %cst_22 = arith.constant dense<0.000000e+00> : vector<64xf32>
    %42 = vector.multi_reduction <add>, %34, %cst_22 [1] : vector<64x128xf32> to vector<64xf32>
    %43 = vector.shape_cast %42 : vector<64xf32> to vector<64x1xf32>
    %cst_23 = arith.constant dense<0.000000e+00> : vector<1xf32>
    %44 = vector.multi_reduction <add>, %43, %cst_23 [0] : vector<64x1xf32> to vector<1xf32>
    %45 = vector.shape_cast %44 : vector<1xf32> to vector<1x1xf32>
    %46 = vector.shape_cast %41 : vector<1x1xf32> to vector<1x1xf32>
    %47 = vector.broadcast %46 : vector<1x1xf32> to vector<8x128xf32>
    %c0_24 = arith.constant 0 : index
    %c0_25 = arith.constant 0 : index
    %48 = vector.load %arg8[%c0_24, %c0_25] : memref<8x128xf32, #tpu.memory_space<vmem>>, vector<8x128xf32>
    tpu.vector_store %arg8[%c0_24, %c0_25], %47 {strides = array<i32>} : memref<8x128xf32, #tpu.memory_space<vmem>>, vector<8x128xf32>,
    %49 = vector.shape_cast %45 : vector<1x1xf32> to vector<1x1xf32>
    %50 = vector.broadcast %49 : vector<1x1xf32> to vector<8x128xf32>
    %c0_26 = arith.constant 0 : index
    %c0_27 = arith.constant 0 : index
    %51 = vector.load %arg9[%c0_26, %c0_27] : memref<8x128xf32, #tpu.memory_space<vmem>>, vector<8x128xf32>
    tpu.vector_store %arg9[%c0_26, %c0_27], %50 {strides = array<i32>} : memref<8x128xf32, #tpu.memory_space<vmem>>, vector<8x128xf32>,
    return
  }
  func.func @transform_0(%arg0: i32) -> (i32, i32) {
    %c0_i32 = arith.constant 0 : i32
    %c0_i32_0 = arith.constant 0 : i32
    return %arg0, %c0_i32 : i32, i32
  }
  func.func @transform_1(%arg0: i32) -> (i32, i32) {
    %c0_i32 = arith.constant 0 : i32
    %c0_i32_0 = arith.constant 0 : i32
    %c0_i32_1 = arith.constant 0 : i32
    return %c0_i32, %c0_i32_0 : i32, i32
  }
  func.func @transform_2(%arg0: i32) -> (i32, i32) {
    %c0_i32 = arith.constant 0 : i32
    %c0_i32_0 = arith.constant 0 : i32
    %c0_i32_1 = arith.constant 0 : i32
    return %c0_i32, %c0_i32_0 : i32, i32
  }
  func.func @transform_3(%arg0: i32) -> (i32, i32) {
    %c0_i32 = arith.constant 0 : i32
    %c0_i32_0 = arith.constant 0 : i32
    %c0_i32_1 = arith.constant 0 : i32
    return %c0_i32, %c0_i32_0 : i32, i32
  }
  func.func @transform_4(%arg0: i32) -> (i32, i32) {
    %c0_i32 = arith.constant 0 : i32
    %c0_i32_0 = arith.constant 0 : i32
    %c0_i32_1 = arith.constant 0 : i32
    return %c0_i32, %c0_i32_0 : i32, i32
  }
  func.func @transform_5(%arg0: i32) -> (i32, i32) {
    %c0_i32 = arith.constant 0 : i32
    %c0_i32_0 = arith.constant 0 : i32
    return %arg0, %c0_i32 : i32, i32
  }
  func.func @transform_6(%arg0: i32) -> (i32, i32) {
    %c0_i32 = arith.constant 0 : i32
    %c0_i32_0 = arith.constant 0 : i32
    return %arg0, %c0_i32 : i32, i32
  }
  func.func @transform_7(%arg0: i32) -> (i32, i32) {
    %c0_i32 = arith.constant 0 : i32
    %c0_i32_0 = arith.constant 0 : i32
    return %arg0, %c0_i32 : i32, i32
  }
  func.func @transform_8(%arg0: i32) -> (i32, i32) {
    %c0_i32 = arith.constant 0 : i32
    %c0_i32_0 = arith.constant 0 : i32
    return %arg0, %c0_i32 : i32, i32
  }
}

</mosaic_0001>

<llo_original>
// kernel: lm_projection_head.1
$region0: #{lm_projection_head.1}
  #allocation0 [shape = 'u32[]', space=smem, size = 0x4, offset = 0x4, fixed_abs, tag = 'smem constant byte address 0x4 - core index']
  #allocation1 [shape = 'u32[144,128]{1,0:T(1,128)}', space=vmem, size = 0x12000, scoped, tag = 'internal scratch']
  %s0 = inlined_call_operand.vmem [shape: bf16[64,128], index: 0, kind: input, shape index: {}]
  %s1 = inlined_call_operand.vmem [shape: bf16[128,128], index: 1, kind: input, shape index: {}]
  %s2 = inlined_call_operand.vmem [shape: f32[1,128], index: 2, kind: input, shape index: {}]
  %s3 = inlined_call_operand.vmem [shape: bf16[128,128], index: 3, kind: input, shape index: {}]
  %s4 = inlined_call_operand.vmem [shape: f32[1,128], index: 4, kind: input, shape index: {}]
  %s5 = inlined_call_operand.vmem [shape: f32[64,128], index: 5, kind: input, shape index: {}]
  %s6 = inlined_call_operand.vmem [shape: f32[64,128], index: 6, kind: output, shape index: {0}]
  %s7 = inlined_call_operand.vmem [shape: f32[8,128], index: 7, kind: output, shape index: {1}]
  %s8 = inlined_call_operand.vmem [shape: f32[8,128], index: 8, kind: output, shape index: {2}]
  %9 = xla_tuple %s6, %s7, %s8
  %s10 = sld [smem:[#allocation0]]
  $region50: #{lm_projection_head.1} parent=0
    _
  %s12 = ssub.s32 1, %s10
  %s13 = scalar_select 0, %s12, %s10
  // Predicated region
  $region2: #{lm_projection_head.1} parent=0 // pred_check
    _
  $region3: #{lm_projection_head.1} parent=0 // pred_check_branch
    %15 = sbr.rel (0) target = $region5
  $region4: #{lm_projection_head.1} parent=0 // pred_region
    _
  $region5: #{lm_projection_head.1} parent=0 // pred_fallthru
    _
  // Predicated region
  $region6: #{lm_projection_head.1} parent=0 // pred_check
    _
  $region7: #{lm_projection_head.1} parent=0 // pred_check_branch
    %17 = sbr.rel (0) target = $region9
  $region8: #{lm_projection_head.1} parent=0 // pred_region
    _
  $region9: #{lm_projection_head.1} parent=0 // pred_fallthru
    _
  // Predicated region
  $region10: #{lm_projection_head.1} parent=0 // pred_check
    _
  $region11: #{lm_projection_head.1} parent=0 // pred_check_branch
    %19 = sbr.rel (0) target = $region13
  $region12: #{lm_projection_head.1} parent=0 // pred_region
    _
  $region13: #{lm_projection_head.1} parent=0 // pred_fallthru
    _
  // Predicated region
  $region14: #{lm_projection_head.1} parent=0 // pred_check
    _
  $region15: #{lm_projection_head.1} parent=0 // pred_check_branch
    %21 = sbr.rel (0) target = $region17
  $region16: #{lm_projection_head.1} parent=0 // pred_region
    _
  $region17: #{lm_projection_head.1} parent=0 // pred_fallthru
    _
  // Predicated region
  $region18: #{lm_projection_head.1} parent=0 // pred_check
    _
  $region19: #{lm_projection_head.1} parent=0 // pred_check_branch
    %23 = sbr.rel (0) target = $region21
  $region20: #{lm_projection_head.1} parent=0 // pred_region
    _
  $region21: #{lm_projection_head.1} parent=0 // pred_fallthru
    _
  // Predicated region
  $region22: #{lm_projection_head.1} parent=0 // pred_check
    _
  $region23: #{lm_projection_head.1} parent=0 // pred_check_branch
    %25 = sbr.rel (0) target = $region25
  $region24: #{lm_projection_head.1} parent=0 // pred_region
    _
  $region25: #{lm_projection_head.1} parent=0 // pred_fallthru
    _
  %v27 = vld [vmem:[%s0] sm:$0xf]
  %v28 = vld [vmem:[%s0 + $0x4] sm:$0xf]
  %v29 = vld [vmem:[%s0 + $0x8] sm:$0xf]
  %v30 = vld [vmem:[%s0 + $0xc] sm:$0xf]
  %v31 = vld [vmem:[%s0 + $0x10] sm:$0xf]
  %v32 = vld [vmem:[%s0 + $0x14] sm:$0xf]
  %v33 = vld [vmem:[%s0 + $0x18] sm:$0xf]
  %v34 = vld [vmem:[%s0 + $0x1c] sm:$0xf]
  %v35 = vld [vmem:[%s1] sm:$0xf]
  %v36 = vld [vmem:[%s1 + $0x4] sm:$0xf]
  %v37 = vld [vmem:[%s1 + $0x8] sm:$0xf]
  %v38 = vld [vmem:[%s1 + $0xc] sm:$0xf]
  %v39 = vld [vmem:[%s1 + $0x10] sm:$0xf]
  %v40 = vld [vmem:[%s1 + $0x14] sm:$0xf]
  %v41 = vld [vmem:[%s1 + $0x18] sm:$0xf]
  %v42 = vld [vmem:[%s1 + $0x1c] sm:$0xf]
  %v43 = vld [vmem:[%s1 + $0x20] sm:$0xf]
  %v44 = vld [vmem:[%s1 + $0x24] sm:$0xf]
  %v45 = vld [vmem:[%s1 + $0x28] sm:$0xf]
  %v46 = vld [vmem:[%s1 + $0x2c] sm:$0xf]
  %v47 = vld [vmem:[%s1 + $0x30] sm:$0xf]
  %v48 = vld [vmem:[%s1 + $0x34] sm:$0xf]
  %v49 = vld [vmem:[%s1 + $0x38] sm:$0xf]
  %v50 = vld [vmem:[%s1 + $0x3c] sm:$0xf]
  %v51 = vld [vmem:[%s2] sm:$0x1]
  %v53 = vlaneseq
  %v54 = vshrl.u32 %v53, 7
  %v55 = vsub.s32 0, %v54
  %v56 = vrot.slane %v51, %v55
  %v66 = vunpack.c.l.b16 %v27
  %v67 = vunpack.c.l.b16 %v28
  %v68 = vunpack.c.l.b16 %v29
  %v69 = vunpack.c.l.b16 %v30
  %v70 = vunpack.c.l.b16 %v31
  %v71 = vunpack.c.l.b16 %v32
  %v72 = vunpack.c.l.b16 %v33
  %v73 = vunpack.c.l.b16 %v34
  %v74 = vpack.c.b16 %v67, %v66
  %v75 = vpack.c.b16 %v69, %v68
  %v76 = vpack.c.b16 %v71, %v70
  %v77 = vpack.c.b16 %v73, %v72
  %v98 = vunpack.c.l.b16 %v35
  %v99 = vunpack.c.l.b16 %v36
  %v100 = vunpack.c.l.b16 %v37
  %v101 = vunpack.c.l.b16 %v38
  %v102 = vunpack.c.l.b16 %v39
  %v103 = vunpack.c.l.b16 %v40
  %v104 = vunpack.c.l.b16 %v41
  %v105 = vunpack.c.l.b16 %v42
  %v106 = vunpack.c.l.b16 %v43
  %v107 = vunpack.c.l.b16 %v44
  %v108 = vunpack.c.l.b16 %v45
  %v109 = vunpack.c.l.b16 %v46
  %v110 = vunpack.c.l.b16 %v47
  %v111 = vunpack.c.l.b16 %v48
  %v112 = vunpack.c.l.b16 %v49
  %v113 = vunpack.c.l.b16 %v50
  %v114 = vpack.c.b16 %v99, %v98
  %v115 = vpack.c.b16 %v101, %v100
  %v116 = vpack.c.b16 %v103, %v102
  %v117 = vpack.c.b16 %v105, %v104
  %v118 = vpack.c.b16 %v107, %v106
  %v119 = vpack.c.b16 %v109, %v108
  %v120 = vpack.c.b16 %v111, %v110
  %v121 = vpack.c.b16 %v113, %v112
  %130 = vmatprep.subr.bf16.mxu0 0
  %131 = vmatpush1.bf16.msra.mxu0 %v114
  %132 = vmatprep.subr.bf16.mxu0 0
  %133 = vmatpush1.bf16.msra.mxu0 %v115
  %134 = vmatprep.subr.bf16.mxu0 0
  %135 = vmatpush1.bf16.msra.mxu0 %v116
  %136 = vmatprep.subr.bf16.mxu0 0
  %137 = vmatpush1.bf16.msra.mxu0 %v117
  %138 = vmatprep.subr.bf16.mxu0 0
  %139 = vmatpush1.bf16.msra.mxu0 %v118
  %140 = vmatprep.subr.bf16.mxu0 0
  %141 = vmatpush1.bf16.msra.mxu0 %v119
  %142 = vmatprep.subr.bf16.mxu0 0
  %143 = vmatpush1.bf16.msra.mxu0 %v120
  %144 = vmatprep.subr.bf16.mxu0 0
  %145 = vmatpush1.bf16.msra.mxu0 %v121
  %146 = vmatprep.subr.bf16.mxu0 0
  %147 = vmatpush1.bf16.msra.mxu0 0
  %148 = vmatprep.subr.bf16.mxu0 0
  %149 = vmatpush1.bf16.msra.mxu0 0
  %150 = vmatprep.subr.bf16.mxu0 0
  %151 = vmatpush1.bf16.msra.mxu0 0
  %152 = vmatprep.subr.bf16.mxu0 0
  %153 = vmatpush1.bf16.msra.mxu0 0
  %154 = vmatprep.subr.bf16.mxu0 0
  %155 = vmatpush1.bf16.msra.mxu0 0
  %156 = vmatprep.subr.bf16.mxu0 0
  %157 = vmatpush1.bf16.msra.mxu0 0
  %158 = vmatprep.subr.bf16.mxu0 0
  %159 = vmatpush1.bf16.msra.mxu0 0
  %160 = vmatprep.subr.bf16.mxu0 0
  %161 = vmatpush1.bf16.msra.mxu0 0
  %162 = vmatprep.mubr.bf16.mxu0 0
  %163 = vmatmul.mubr.bf16.gmra.mrb[0].mxu0 %v74
  %v164 = vpop.f32.mrb[0].mxu0
  %v165 = vadd.f32 %v56, %v164
  %v166 = vpop.f32.mrb[0].mxu0
  %v167 = vpop.f32.mrb[0].mxu0
  %v168 = vadd.f32 %v56, %v167
  %v169 = vpop.f32.mrb[0].mxu0
  %170 = vmatprep.mubr.bf16.mxu0 0
  %171 = vmatmul.mubr.bf16.gmra.mrb[0].mxu0 %v75
  %v172 = vpop.f32.mrb[0].mxu0
  %v173 = vadd.f32 %v56, %v172
  %v174 = vpop.f32.mrb[0].mxu0
  %v175 = vpop.f32.mrb[0].mxu0
  %v176 = vadd.f32 %v56, %v175
  %v177 = vpop.f32.mrb[0].mxu0
  %178 = vmatprep.mubr.bf16.mxu0 0
  %179 = vmatmul.mubr.bf16.gmra.mrb[0].mxu0 %v76
  %v180 = vpop.f32.mrb[0].mxu0
  %v181 = vadd.f32 %v56, %v180
  %v182 = vpop.f32.mrb[0].mxu0
  %v183 = vpop.f32.mrb[0].mxu0
  %v184 = vadd.f32 %v56, %v183
  %v185 = vpop.f32.mrb[0].mxu0
  %186 = vmatprep.mubr.bf16.mxu0 0
  %187 = vmatmul.mubr.bf16.gmra.mrb[0].mxu0 %v77
  %v188 = vpop.f32.mrb[0].mxu0
  %v189 = vadd.f32 %v56, %v188
  %v190 = vpop.f32.mrb[0].mxu0
  %v191 = vpop.f32.mrb[0].mxu0
  %v192 = vadd.f32 %v56, %v191
  %v193 = vpop.f32.mrb[0].mxu0
  %194 = vdwg.mxu0
  %v195 = vmul.f32 %v165, 0.5
  %v196 = vmul.f32 %v168, 0.5
  %v197 = vmul.f32 %v173, 0.5
  %v198 = vmul.f32 %v176, 0.5
  %v199 = vmul.f32 %v181, 0.5
  %v200 = vmul.f32 %v184, 0.5
  %v201 = vmul.f32 %v189, 0.5
  %v202 = vmul.f32 %v192, 0.5
  %v203 = vmul.f32 %v165, 0.70710677
  %v204 = vmul.f32 %v168, 0.70710677
  %v205 = vmul.f32 %v173, 0.70710677
  %v206 = vmul.f32 %v176, 0.70710677
  %v207 = vmul.f32 %v181, 0.70710677
  %v208 = vmul.f32 %v184, 0.70710677
  %v209 = vmul.f32 %v189, 0.70710677
  %v210 = vmul.f32 %v192, 0.70710677
  %v211 = verf.f32.pop %v203
  %v212 = verf.f32.pop %v204
  %v213 = verf.f32.pop %v205
  %v214 = verf.f32.pop %v206
  %v215 = verf.f32.pop %v207
  %v216 = verf.f32.pop %v208
  %v217 = verf.f32.pop %v209
  %v218 = verf.f32.pop %v210
  %v219 = vadd.f32 %v211, 1.0
  %v220 = vadd.f32 %v212, 1.0
  %v221 = vadd.f32 %v213, 1.0
  %v222 = vadd.f32 %v214, 1.0
  %v223 = vadd.f32 %v215, 1.0
  %v224 = vadd.f32 %v216, 1.0
  %v225 = vadd.f32 %v217, 1.0
  %v226 = vadd.f32 %v218, 1.0
  %v227 = vmul.f32 %v195, %v219
  %v228 = vmul.f32 %v196, %v220
  %v229 = vmul.f32 %v197, %v221
  %v230 = vmul.f32 %v198, %v222
  %v231 = vmul.f32 %v199, %v223
  %v232 = vmul.f32 %v200, %v224
  %v233 = vmul.f32 %v201, %v225
  %v234 = vmul.f32 %v202, %v226
  %v235 = vpack.c.bf16 %v228, %v227
  %v236 = vpack.c.bf16 %v230, %v229
  %v237 = vpack.c.bf16 %v232, %v231
  %v238 = vpack.c.bf16 %v234, %v233
  %v239 = vld [vmem:[%s3] sm:$0xf]
  %v240 = vld [vmem:[%s3 + $0x4] sm:$0xf]
  %v241 = vld [vmem:[%s3 + $0x8] sm:$0xf]
  %v242 = vld [vmem:[%s3 + $0xc] sm:$0xf]
  %v243 = vld [vmem:[%s3 + $0x10] sm:$0xf]
  %v244 = vld [vmem:[%s3 + $0x14] sm:$0xf]
  %v245 = vld [vmem:[%s3 + $0x18] sm:$0xf]
  %v246 = vld [vmem:[%s3 + $0x1c] sm:$0xf]
  %v247 = vld [vmem:[%s3 + $0x20] sm:$0xf]
  %v248 = vld [vmem:[%s3 + $0x24] sm:$0xf]
  %v249 = vld [vmem:[%s3 + $0x28] sm:$0xf]
  %v250 = vld [vmem:[%s3 + $0x2c] sm:$0xf]
  %v251 = vld [vmem:[%s3 + $0x30] sm:$0xf]
  %v252 = vld [vmem:[%s3 + $0x34] sm:$0xf]
  %v253 = vld [vmem:[%s3 + $0x38] sm:$0xf]
  %v254 = vld [vmem:[%s3 + $0x3c] sm:$0xf]
  %v255 = vld [vmem:[%s4] sm:$0x1]
  %v257 = vlaneseq
  %v258 = vshrl.u32 %v257, 7
  %v259 = vsub.s32 0, %v258
  %v260 = vrot.slane %v255, %v259
  %v278 = vunpack.c.l.b16 %v239
  %v279 = vunpack.c.l.b16 %v240
  %v280 = vunpack.c.l.b16 %v241
  %v281 = vunpack.c.l.b16 %v242
  %v282 = vunpack.c.l.b16 %v243
  %v283 = vunpack.c.l.b16 %v244
  %v284 = vunpack.c.l.b16 %v245
  %v285 = vunpack.c.l.b16 %v246
  %v286 = vunpack.c.l.b16 %v247
  %v287 = vunpack.c.l.b16 %v248
  %v288 = vunpack.c.l.b16 %v249
  %v289 = vunpack.c.l.b16 %v250
  %v290 = vunpack.c.l.b16 %v251
  %v291 = vunpack.c.l.b16 %v252
  %v292 = vunpack.c.l.b16 %v253
  %v293 = vunpack.c.l.b16 %v254
  %v294 = vpack.c.b16 %v279, %v278
  %v295 = vpack.c.b16 %v281, %v280
  %v296 = vpack.c.b16 %v283, %v282
  %v297 = vpack.c.b16 %v285, %v284
  %v298 = vpack.c.b16 %v287, %v286
  %v299 = vpack.c.b16 %v289, %v288
  %v300 = vpack.c.b16 %v291, %v290
  %v301 = vpack.c.b16 %v293, %v292
  %310 = vmatprep.subr.bf16.mxu0 0
  %311 = vmatpush1.bf16.msra.mxu0 %v294
  %312 = vmatprep.subr.bf16.mxu0 0
  %313 = vmatpush1.bf16.msra.mxu0 %v295
  %314 = vmatprep.subr.bf16.mxu0 0
  %315 = vmatpush1.bf16.msra.mxu0 %v296
  %316 = vmatprep.subr.bf16.mxu0 0
  %317 = vmatpush1.bf16.msra.mxu0 %v297
  %318 = vmatprep.subr.bf16.mxu0 0
  %319 = vmatpush1.bf16.msra.mxu0 %v298
  %320 = vmatprep.subr.bf16.mxu0 0
  %321 = vmatpush1.bf16.msra.mxu0 %v299
  %322 = vmatprep.subr.bf16.mxu0 0
  %323 = vmatpush1.bf16.msra.mxu0 %v300
  %324 = vmatprep.subr.bf16.mxu0 0
  %325 = vmatpush1.bf16.msra.mxu0 %v301
  %326 = vmatprep.subr.bf16.mxu0 0
  %327 = vmatpush1.bf16.msra.mxu0 0
  %328 = vmatprep.subr.bf16.mxu0 0
  %329 = vmatpush1.bf16.msra.mxu0 0
  %330 = vmatprep.subr.bf16.mxu0 0
  %331 = vmatpush1.bf16.msra.mxu0 0
  %332 = vmatprep.subr.bf16.mxu0 0
  %333 = vmatpush1.bf16.msra.mxu0 0
  %334 = vmatprep.subr.bf16.mxu0 0
  %335 = vmatpush1.bf16.msra.mxu0 0
  %336 = vmatprep.subr.bf16.mxu0 0
  %337 = vmatpush1.bf16.msra.mxu0 0
  %338 = vmatprep.subr.bf16.mxu0 0
  %339 = vmatpush1.bf16.msra.mxu0 0
  %340 = vmatprep.subr.bf16.mxu0 0
  %341 = vmatpush1.bf16.msra.mxu0 0
  %342 = vmatprep.mubr.bf16.mxu0 0
  %343 = vmatmul.mubr.bf16.gmra.mrb[0].mxu0 %v235
  %v344 = vpop.f32.mrb[0].mxu0
  %v345 = vadd.f32 %v260, %v344
  %v346 = vpop.f32.mrb[0].mxu0
  %v347 = vpop.f32.mrb[0].mxu0
  %v348 = vadd.f32 %v260, %v347
  %v349 = vpop.f32.mrb[0].mxu0
  %350 = vmatprep.mubr.bf16.mxu0 0
  %351 = vmatmul.mubr.bf16.gmra.mrb[0].mxu0 %v236
  %v352 = vpop.f32.mrb[0].mxu0
  %v353 = vadd.f32 %v260, %v352
  %v354 = vpop.f32.mrb[0].mxu0
  %v355 = vpop.f32.mrb[0].mxu0
  %v356 = vadd.f32 %v260, %v355
  %v357 = vpop.f32.mrb[0].mxu0
  %358 = vmatprep.mubr.bf16.mxu0 0
  %359 = vmatmul.mubr.bf16.gmra.mrb[0].mxu0 %v237
  %v360 = vpop.f32.mrb[0].mxu0
  %v361 = vadd.f32 %v260, %v360
  %v362 = vpop.f32.mrb[0].mxu0
  %v363 = vpop.f32.mrb[0].mxu0
  %v364 = vadd.f32 %v260, %v363
  %v365 = vpop.f32.mrb[0].mxu0
  %366 = vmatprep.mubr.bf16.mxu0 0
  %367 = vmatmul.mubr.bf16.gmra.mrb[0].mxu0 %v238
  %v368 = vpop.f32.mrb[0].mxu0
  %v369 = vadd.f32 %v260, %v368
  %v370 = vpop.f32.mrb[0].mxu0
  %v371 = vpop.f32.mrb[0].mxu0
  %v372 = vadd.f32 %v260, %v371
  %v373 = vpop.f32.mrb[0].mxu0
  %374 = vdwg.mxu0
  %375 = vmax.xlane.f32.xlu0 %v345
  %v376 = vpop.xlane.xlu0 %375
  %377 = vmax.xlane.f32.xlu0 %v348
  %v378 = vpop.xlane.xlu0 %377
  %379 = vmax.xlane.f32.xlu0 %v353
  %v380 = vpop.xlane.xlu0 %379
  %381 = vmax.xlane.f32.xlu0 %v356
  %v382 = vpop.xlane.xlu0 %381
  %383 = vmax.xlane.f32.xlu0 %v361
  %v384 = vpop.xlane.xlu0 %383
  %385 = vmax.xlane.f32.xlu0 %v364
  %v386 = vpop.xlane.xlu0 %385
  %387 = vmax.xlane.f32.xlu0 %v369
  %v388 = vpop.xlane.xlu0 %387
  %389 = vmax.xlane.f32.xlu0 %v372
  %v390 = vpop.xlane.xlu0 %389
  %v391 = vsub.f32 %v345, %v376
  %v392 = vsub.f32 %v348, %v378
  %v393 = vsub.f32 %v353, %v380
  %v394 = vsub.f32 %v356, %v382
  %v395 = vsub.f32 %v361, %v384
  %v396 = vsub.f32 %v364, %v386
  %v397 = vsub.f32 %v369, %v388
  %v398 = vsub.f32 %v372, %v390
  %v399 = vmul.f32 %v391, 1.442695
  %v400 = vpow.pop %v399
  %v401 = vmul.f32 %v392, 1.442695
  %v402 = vpow.pop %v401
  %v403 = vmul.f32 %v393, 1.442695
  %v404 = vpow.pop %v403
  %v405 = vmul.f32 %v394, 1.442695
  %v406 = vpow.pop %v405
  %v407 = vmul.f32 %v395, 1.442695
  %v408 = vpow.pop %v407
  %v409 = vmul.f32 %v396, 1.442695
  %v410 = vpow.pop %v409
  %v411 = vmul.f32 %v397, 1.442695
  %v412 = vpow.pop %v411
  %v413 = vmul.f32 %v398, 1.442695
  %v414 = vpow.pop %v413
  %415 = vadd.xlane.f32.xlu0 %v400
  %v416 = vpop.xlane.xlu0 %415
  %417 = vadd.xlane.f32.xlu0 %v402
  %v418 = vpop.xlane.xlu0 %417
  %419 = vadd.xlane.f32.xlu0 %v404
  %v420 = vpop.xlane.xlu0 %419
  %421 = vadd.xlane.f32.xlu0 %v406
  %v422 = vpop.xlane.xlu0 %421
  %423 = vadd.xlane.f32.xlu0 %v408
  %v424 = vpop.xlane.xlu0 %423
  %425 = vadd.xlane.f32.xlu0 %v410
  %v426 = vpop.xlane.xlu0 %425
  %427 = vadd.xlane.f32.xlu0 %v412
  %v428 = vpop.xlane.xlu0 %427
  %429 = vadd.xlane.f32.xlu0 %v414
  %v430 = vpop.xlane.xlu0 %429
  %v431 = vrcp.pop %v416
  %v432 = vrcp.pop %v418
  %v433 = vrcp.pop %v420
  %v434 = vrcp.pop %v422
  %v435 = vrcp.pop %v424
  %v436 = vrcp.pop %v426
  %v437 = vrcp.pop %v428
  %v438 = vrcp.pop %v430
  %v439 = vmul.f32 %v400, %v431
  %v440 = vmul.f32 %v402, %v432
  %v441 = vmul.f32 %v404, %v433
  %v442 = vmul.f32 %v406, %v434
  %v443 = vmul.f32 %v408, %v435
  %v444 = vmul.f32 %v410, %v436
  %v445 = vmul.f32 %v412, %v437
  %v446 = vmul.f32 %v414, %v438
  %447 = vst [vmem:[%s6] sm:$0xff] %v439
  %448 = vst [vmem:[%s6 + $0x8] sm:$0xff] %v440
  %449 = vst [vmem:[%s6 + $0x10] sm:$0xff] %v441
  %450 = vst [vmem:[%s6 + $0x18] sm:$0xff] %v442
  %451 = vst [vmem:[%s6 + $0x20] sm:$0xff] %v443
  %452 = vst [vmem:[%s6 + $0x28] sm:$0xff] %v444
  %453 = vst [vmem:[%s6 + $0x30] sm:$0xff] %v445
  %454 = vst [vmem:[%s6 + $0x38] sm:$0xff] %v446
  %v455 = vlog2.pop %v416
  %v456 = vmul.f32 %v455, 0.6931472
  %v457 = vlog2.pop %v418
  %v458 = vmul.f32 %v457, 0.6931472
  %v459 = vlog2.pop %v420
  %v460 = vmul.f32 %v459, 0.6931472
  %v461 = vlog2.pop %v422
  %v462 = vmul.f32 %v461, 0.6931472
  %v463 = vlog2.pop %v424
  %v464 = vmul.f32 %v463, 0.6931472
  %v465 = vlog2.pop %v426
  %v466 = vmul.f32 %v465, 0.6931472
  %v467 = vlog2.pop %v428
  %v468 = vmul.f32 %v467, 0.6931472
  %v469 = vlog2.pop %v430
  %v470 = vmul.f32 %v469, 0.6931472
  %v471 = vsub.f32 %v391, %v456
  %v472 = vsub.f32 %v392, %v458
  %v473 = vsub.f32 %v393, %v460
  %v474 = vsub.f32 %v394, %v462
  %v475 = vsub.f32 %v395, %v464
  %v476 = vsub.f32 %v396, %v466
  %v477 = vsub.f32 %v397, %v468
  %v478 = vsub.f32 %v398, %v470
  %v479 = vld [vmem:[%s5] sm:$0xff]
  %v480 = vld [vmem:[%s5 + $0x8] sm:$0xff]
  %v481 = vld [vmem:[%s5 + $0x10] sm:$0xff]
  %v482 = vld [vmem:[%s5 + $0x18] sm:$0xff]
  %v483 = vld [vmem:[%s5 + $0x20] sm:$0xff]
  %v484 = vld [vmem:[%s5 + $0x28] sm:$0xff]
  %v485 = vld [vmem:[%s5 + $0x30] sm:$0xff]
  %v486 = vld [vmem:[%s5 + $0x38] sm:$0xff]
  %v487 = vsub.f32 0.0, %v479
  %v488 = vsub.f32 0.0, %v480
  %v489 = vsub.f32 0.0, %v481
  %v490 = vsub.f32 0.0, %v482
  %v491 = vsub.f32 0.0, %v483
  %v492 = vsub.f32 0.0, %v484
  %v493 = vsub.f32 0.0, %v485
  %v494 = vsub.f32 0.0, %v486
  %v495 = vmul.f32 %v487, %v471
  %v496 = vmul.f32 %v488, %v472
  %v497 = vmul.f32 %v489, %v473
  %v498 = vmul.f32 %v490, %v474
  %v499 = vmul.f32 %v491, %v475
  %v500 = vmul.f32 %v492, %v476
  %v501 = vmul.f32 %v493, %v477
  %v502 = vmul.f32 %v494, %v478
  %503 = vadd.xlane.f32.xlu0 %v495
  %v504 = vpop.xlane.xlu0 %503
  %505 = vadd.xlane.f32.xlu0 %v496
  %v506 = vpop.xlane.xlu0 %505
  %507 = vadd.xlane.f32.xlu0 %v497
  %v508 = vpop.xlane.xlu0 %507
  %509 = vadd.xlane.f32.xlu0 %v498
  %v510 = vpop.xlane.xlu0 %509
  %511 = vadd.xlane.f32.xlu0 %v499
  %v512 = vpop.xlane.xlu0 %511
  %513 = vadd.xlane.f32.xlu0 %v500
  %v514 = vpop.xlane.xlu0 %513
  %515 = vadd.xlane.f32.xlu0 %v501
  %v516 = vpop.xlane.xlu0 %515
  %517 = vadd.xlane.f32.xlu0 %v502
  %v518 = vpop.xlane.xlu0 %517
  %v519 = vadd.f32 %v504, %v506
  %v520 = vadd.f32 %v519, %v508
  %v521 = vadd.f32 %v520, %v510
  %v522 = vadd.f32 %v521, %v512
  %v523 = vadd.f32 %v522, %v514
  %v524 = vadd.f32 %v523, %v516
  %v525 = vadd.f32 %v524, %v518
  %v526 = vrot.slane %v525, 4
  %v527 = vadd.f32 %v525, %v526
  %v528 = vrot.slane %v527, 2
  %v529 = vadd.f32 %v527, %v528
  %v530 = vrot.slane %v529, 1
  %v531 = vadd.f32 %v529, %v530
  %532 = vadd.xlane.f32.xlu0 %v479
  %v533 = vpop.xlane.xlu0 %532
  %534 = vadd.xlane.f32.xlu0 %v480
  %v535 = vpop.xlane.xlu0 %534
  %536 = vadd.xlane.f32.xlu0 %v481
  %v537 = vpop.xlane.xlu0 %536
  %538 = vadd.xlane.f32.xlu0 %v482
  %v539 = vpop.xlane.xlu0 %538
  %540 = vadd.xlane.f32.xlu0 %v483
  %v541 = vpop.xlane.xlu0 %540
  %542 = vadd.xlane.f32.xlu0 %v484
  %v543 = vpop.xlane.xlu0 %542
  %544 = vadd.xlane.f32.xlu0 %v485
  %v545 = vpop.xlane.xlu0 %544
  %546 = vadd.xlane.f32.xlu0 %v486
  %v547 = vpop.xlane.xlu0 %546
  %v548 = vadd.f32 %v533, %v535
  %v549 = vadd.f32 %v548, %v537
  %v550 = vadd.f32 %v549, %v539
  %v551 = vadd.f32 %v550, %v541
  %v552 = vadd.f32 %v551, %v543
  %v553 = vadd.f32 %v552, %v545
  %v554 = vadd.f32 %v553, %v547
  %v555 = vrot.slane %v554, 4
  %v556 = vadd.f32 %v554, %v555
  %v557 = vrot.slane %v556, 2
  %v558 = vadd.f32 %v556, %v557
  %v559 = vrot.slane %v558, 1
  %v560 = vadd.f32 %v558, %v559
  %561 = vst [vmem:[%s7] sm:$0xff] %v531
  %562 = vst [vmem:[%s8] sm:$0xff] %v560
  // Predicated region
  $region26: #{lm_projection_head.1} parent=0 // pred_check
    _
  $region27: #{lm_projection_head.1} parent=0 // pred_check_branch
    %564 = sbr.rel (0) target = $region29
  $region28: #{lm_projection_head.1} parent=0 // pred_region
    _
  $region29: #{lm_projection_head.1} parent=0 // pred_fallthru
    _
  // Predicated region
  $region30: #{lm_projection_head.1} parent=0 // pred_check
    _
  $region31: #{lm_projection_head.1} parent=0 // pred_check_branch
    %566 = sbr.rel (0) target = $region33
  $region32: #{lm_projection_head.1} parent=0 // pred_region
    _
  $region33: #{lm_projection_head.1} parent=0 // pred_fallthru
    _
  // Predicated region
  $region34: #{lm_projection_head.1} parent=0 // pred_check
    _
  $region35: #{lm_projection_head.1} parent=0 // pred_check_branch
    %568 = sbr.rel (0) target = $region37
  $region36: #{lm_projection_head.1} parent=0 // pred_region
    _
  $region37: #{lm_projection_head.1} parent=0 // pred_fallthru
    _
  // Predicated region
  $region38: #{lm_projection_head.1} parent=0 // pred_check
    _
  $region39: #{lm_projection_head.1} parent=0 // pred_check_branch
    %570 = sbr.rel (0) target = $region41
  $region40: #{lm_projection_head.1} parent=0 // pred_region
    _
  $region41: #{lm_projection_head.1} parent=0 // pred_fallthru
    _
  // Predicated region
  $region42: #{lm_projection_head.1} parent=0 // pred_check
    _
  $region43: #{lm_projection_head.1} parent=0 // pred_check_branch
    %572 = sbr.rel (0) target = $region45
  $region44: #{lm_projection_head.1} parent=0 // pred_region
    _
  $region45: #{lm_projection_head.1} parent=0 // pred_fallthru
    _
  // Predicated region
  $region46: #{lm_projection_head.1} parent=0 // pred_check
    _
  $region47: #{lm_projection_head.1} parent=0 // pred_check_branch
    %574 = sbr.rel (0) target = $region49
  $region48: #{lm_projection_head.1} parent=0 // pred_region
    _
  $region49: #{lm_projection_head.1} parent=0 // pred_fallthru
    _

</llo_original>
